<compile_context>
chip_gen: v5e
topology: v5e:2x2
jax: 0.10.0
libtpu: 0.0.40
codegen_flags: <defaults>
</compile_context>

<pallas_src>
import jax
import jax.numpy as jnp
from jax.experimental import pallas as pl
from jax.experimental.pallas import tpu as pltpu

_LANE = 128      # lane width (last dim granularity)
_SUBLANE = 8     # sublane width (second-to-last dim granularity)


def _round_up(x, m):
    return ((x + m - 1) // m) * m


def _leaky_relu(v, negative_slope=0.01):
    # matches torch.nn.functional.leaky_relu default (negative_slope=0.01)
    return jnp.where(v > 0, v, negative_slope * v)


def mlp_kernel(x_ref,
               w1_ref, b1_ref,
               w2_ref, b2_ref,
               w3_ref, b3_ref,
               w4_ref, b4_ref,
               o_ref):
    h = x_ref[...]
    h = _leaky_relu(jnp.dot(h, w1_ref[...],
                            preferred_element_type=jnp.float32) + b1_ref[...])
    h = _leaky_relu(jnp.dot(h, w2_ref[...],
                            preferred_element_type=jnp.float32) + b2_ref[...])
    h = _leaky_relu(jnp.dot(h, w3_ref[...],
                            preferred_element_type=jnp.float32) + b3_ref[...])
    h = jnp.dot(h, w4_ref[...],
                preferred_element_type=jnp.float32) + b4_ref[...]
    o_ref[...] = h.astype(o_ref.dtype)


def mlp_forward(x, params, *, block_batch=512):
    """x: (B, input_size) f32; params: w{i} as (in, out), b{i} as (1, out)."""
    B, K = x.shape
    H = params["w1"].shape[1]
    O = params["w4"].shape[1]

    # --- lane-dense feature padding (zero pad is mathematically inert) ---
    Kp = _round_up(K, _LANE)
    Hp = _round_up(H, _LANE)
    Op = _round_up(O, _LANE)

    def pad2(a, rows, cols):
        return jnp.pad(a, ((0, rows - a.shape[0]), (0, cols - a.shape[1])))

    w1 = pad2(params["w1"], Kp, Hp); b1 = pad2(params["b1"], 1, Hp)
    w2 = pad2(params["w2"], Hp, Hp); b2 = pad2(params["b2"], 1, Hp)
    w3 = pad2(params["w3"], Hp, Hp); b3 = pad2(params["b3"], 1, Hp)
    w4 = pad2(params["w4"], Hp, Op); b4 = pad2(params["b4"], 1, Op)

    # --- batch tiling: stream (tb, feat) tiles, weights stay resident ---
    b_min = _round_up(B, _SUBLANE)
    tb = min(_round_up(block_batch, _SUBLANE), b_min)
    Bp = _round_up(b_min, tb)
    xp = pad2(x, Bp, Kp)

    grid = (Bp // tb,)

    def stream_spec(cols):
        return pl.BlockSpec((tb, cols), lambda i: (i, 0))

    def resident_spec(a):
        return pl.BlockSpec(a.shape, lambda i: (0,) * a.ndim)

    # Advisory cost estimate for XLA scheduling around the custom call.
    flops = 2 * Bp * (Kp * Hp + 2 * Hp * Hp + Hp * Op)
    bytes_accessed = 4 * (Bp * Kp + Bp * Op                      # streamed x / out
                          + Kp * Hp + 2 * Hp * Hp + Hp * Op      # weights
                          + 3 * Hp + Op)                         # biases
    cost = pl.CostEstimate(flops=flops, transcendentals=0,
                           bytes_accessed=bytes_accessed)

    # VMEM budget: resident weights/biases + double-buffered x/out tiles +
    # a few live (tb, Hp) f32 intermediates.  Give 2x headroom, keep it well
    # under v7x's 64 MiB physical VMEM.
    vmem_est = 4 * (Kp * Hp + 2 * Hp * Hp + Hp * Op + 3 * Hp + Op
                    + 2 * tb * (Kp + Op)
                    + 4 * tb * Hp)
    vmem_limit = int(min(max(2 * vmem_est, 32 << 20), 48 << 20))

    out = pl.pallas_call(
        mlp_kernel,
        out_shape=jax.ShapeDtypeStruct((Bp, Op), jnp.float32),
        grid=grid,
        in_specs=[stream_spec(Kp),
                  resident_spec(w1), resident_spec(b1),
                  resident_spec(w2), resident_spec(b2),
                  resident_spec(w3), resident_spec(b3),
                  resident_spec(w4), resident_spec(b4)],
        out_specs=stream_spec(Op),
        compiler_params=pltpu.CompilerParams(
            dimension_semantics=("parallel",),   # shard batch tiles across TCs
            vmem_limit_bytes=vmem_limit),
        cost_estimate=cost,
    )(xp, w1, b1, w2, b2, w3, b3, w4, b4)

    return out[:B, :O]


def init_mlp_params(key, input_size, hidden_dim, output_size):
    """Deterministic init mimicking torch.nn.Linear (uniform +/- 1/sqrt(fan_in))."""
    dims = [(input_size, hidden_dim),
            (hidden_dim, hidden_dim),
            (hidden_dim, hidden_dim),
            (hidden_dim, output_size)]
    params = {}
    for idx, (fan_in, fan_out) in enumerate(dims, start=1):
        key, kw, kb = jax.random.split(key, 3)
        bound = 1.0 / (fan_in ** 0.5)
        # stored as (in, out) == transpose of PyTorch's (out, in)
        params[f"w{idx}"] = jax.random.uniform(
            kw, (fan_in, fan_out), jnp.float32, -bound, bound)
        params[f"b{idx}"] = jax.random.uniform(
            kb, (1, fan_out), jnp.float32, -bound, bound)
    return params


def mlp_reference(x, params):
    """Plain-JAX reference for correctness checking."""
    h = x
    for idx in range(1, 4):
        h = _leaky_relu(h @ params[f"w{idx}"] + params[f"b{idx}"])
    return h @ params["w4"] + params["b4"]


if __name__ == "__main__":
    key = jax.random.PRNGKey(0)

    # Small shapes consistent with the PyTorch MLP module.
    batch = 8
    input_size = 16
    hidden_dim = 32
    output_size = 8

    key, kx = jax.random.split(key)
    x = jax.random.normal(kx, (batch, input_size), dtype=jnp.float32)
    params = init_mlp_params(key, input_size, hidden_dim, output_size)

    out = jax.block_until_ready(mlp_forward(x, params))

    ref = mlp_reference(x, params)
    assert out.shape == (batch, output_size)
    assert jnp.allclose(out, ref, atol=1e-5, rtol=1e-5), "mismatch vs reference"

    print("KERNEL_OK")
</pallas_src>

<mosaic_0001>
module attributes {stable_mosaic.version = 11 : i64} {
  func.func @mlp_kernel(%arg0: i32, %arg1: memref<8x128xf32, #tpu.memory_space<vmem>>, %arg2: memref<128x128xf32, #tpu.memory_space<vmem>>, %arg3: memref<1x128xf32, #tpu.memory_space<vmem>>, %arg4: memref<128x128xf32, #tpu.memory_space<vmem>>, %arg5: memref<1x128xf32, #tpu.memory_space<vmem>>, %arg6: memref<128x128xf32, #tpu.memory_space<vmem>>, %arg7: memref<1x128xf32, #tpu.memory_space<vmem>>, %arg8: memref<128x128xf32, #tpu.memory_space<vmem>>, %arg9: memref<1x128xf32, #tpu.memory_space<vmem>>, %arg10: memref<8x128xf32, #tpu.memory_space<vmem>>) attributes {dimension_semantics = [#tpu.dimension_semantics<parallel>], iteration_bounds = array<i64: 1>, scalar_prefetch = 0 : i64, scratch_operands = 0 : i64, tpu.core_type = #tpu.core_type<tc>, window_params = [{transform_indices = @transform_0, window_bounds = array<i64: 8, 128>}, {pipeline_mode = #tpu.pipeline_mode<synchronous>, transform_indices = @transform_1, window_bounds = array<i64: 128, 128>}, {pipeline_mode = #tpu.pipeline_mode<synchronous>, transform_indices = @transform_2, window_bounds = array<i64: 1, 128>}, {pipeline_mode = #tpu.pipeline_mode<synchronous>, transform_indices = @transform_3, window_bounds = array<i64: 128, 128>}, {pipeline_mode = #tpu.pipeline_mode<synchronous>, transform_indices = @transform_4, window_bounds = array<i64: 1, 128>}, {pipeline_mode = #tpu.pipeline_mode<synchronous>, transform_indices = @transform_5, window_bounds = array<i64: 128, 128>}, {pipeline_mode = #tpu.pipeline_mode<synchronous>, transform_indices = @transform_6, window_bounds = array<i64: 1, 128>}, {pipeline_mode = #tpu.pipeline_mode<synchronous>, transform_indices = @transform_7, window_bounds = array<i64: 128, 128>}, {pipeline_mode = #tpu.pipeline_mode<synchronous>, transform_indices = @transform_8, window_bounds = array<i64: 1, 128>}, {transform_indices = @transform_9, window_bounds = array<i64: 8, 128>}]} {
    %c0 = arith.constant 0 : index
    %c0_0 = arith.constant 0 : index
    %0 = vector.load %arg1[%c0, %c0_0] : memref<8x128xf32, #tpu.memory_space<vmem>>, vector<8x128xf32>
    %c0_1 = arith.constant 0 : index
    %c0_2 = arith.constant 0 : index
    %1 = vector.load %arg2[%c0_1, %c0_2] : memref<128x128xf32, #tpu.memory_space<vmem>>, vector<128x128xf32>
    %cst = arith.constant dense<0.000000e+00> : vector<8x128xf32>
    %2 = tpu.matmul %0, %1, %cst {dimension_numbers = #tpu.dot_dimension_numbers<[1], [0], [0], [1], [0, 0, 1, 1], [], []>} : vector<8x128xf32>, vector<128x128xf32>, vector<8x128xf32> -> vector<8x128xf32>
    %c0_3 = arith.constant 0 : index
    %c0_4 = arith.constant 0 : index
    %3 = vector.load %arg3[%c0_3, %c0_4] : memref<1x128xf32, #tpu.memory_space<vmem>>, vector<1x128xf32>
    %4 = vector.broadcast %3 : vector<1x128xf32> to vector<8x128xf32>
    %5 = arith.addf %2, %4 : vector<8x128xf32>
    %cst_5 = arith.constant 0.000000e+00 : f32
    %6 = vector.broadcast %cst_5 : f32 to vector<8x128xf32>
    %7 = arith.cmpf ogt, %5, %6 : vector<8x128xf32>
    %cst_6 = arith.constant 0.00999999977 : f32
    %8 = vector.broadcast %cst_6 : f32 to vector<8x128xf32>
    %9 = arith.mulf %8, %5 : vector<8x128xf32>
    %10 = arith.select %7, %5, %9 : vector<8x128xi1>, vector<8x128xf32>
    %c0_7 = arith.constant 0 : index
    %c0_8 = arith.constant 0 : index
    %11 = vector.load %arg4[%c0_7, %c0_8] : memref<128x128xf32, #tpu.memory_space<vmem>>, vector<128x128xf32>
    %cst_9 = arith.constant dense<0.000000e+00> : vector<8x128xf32>
    %12 = tpu.matmul %10, %11, %cst_9 {dimension_numbers = #tpu.dot_dimension_numbers<[1], [0], [0], [1], [0, 0, 1, 1], [], []>} : vector<8x128xf32>, vector<128x128xf32>, vector<8x128xf32> -> vector<8x128xf32>
    %c0_10 = arith.constant 0 : index
    %c0_11 = arith.constant 0 : index
    %13 = vector.load %arg5[%c0_10, %c0_11] : memref<1x128xf32, #tpu.memory_space<vmem>>, vector<1x128xf32>
    %14 = vector.broadcast %13 : vector<1x128xf32> to vector<8x128xf32>
    %15 = arith.addf %12, %14 : vector<8x128xf32>
    %cst_12 = arith.constant 0.000000e+00 : f32
    %16 = vector.broadcast %cst_12 : f32 to vector<8x128xf32>
    %17 = arith.cmpf ogt, %15, %16 : vector<8x128xf32>
    %cst_13 = arith.constant 0.00999999977 : f32
    %18 = vector.broadcast %cst_13 : f32 to vector<8x128xf32>
    %19 = arith.mulf %18, %15 : vector<8x128xf32>
    %20 = arith.select %17, %15, %19 : vector<8x128xi1>, vector<8x128xf32>
    %c0_14 = arith.constant 0 : index
    %c0_15 = arith.constant 0 : index
    %21 = vector.load %arg6[%c0_14, %c0_15] : memref<128x128xf32, #tpu.memory_space<vmem>>, vector<128x128xf32>
    %cst_16 = arith.constant dense<0.000000e+00> : vector<8x128xf32>
    %22 = tpu.matmul %20, %21, %cst_16 {dimension_numbers = #tpu.dot_dimension_numbers<[1], [0], [0], [1], [0, 0, 1, 1], [], []>} : vector<8x128xf32>, vector<128x128xf32>, vector<8x128xf32> -> vector<8x128xf32>
    %c0_17 = arith.constant 0 : index
    %c0_18 = arith.constant 0 : index
    %23 = vector.load %arg7[%c0_17, %c0_18] : memref<1x128xf32, #tpu.memory_space<vmem>>, vector<1x128xf32>
    %24 = vector.broadcast %23 : vector<1x128xf32> to vector<8x128xf32>
    %25 = arith.addf %22, %24 : vector<8x128xf32>
    %cst_19 = arith.constant 0.000000e+00 : f32
    %26 = vector.broadcast %cst_19 : f32 to vector<8x128xf32>
    %27 = arith.cmpf ogt, %25, %26 : vector<8x128xf32>
    %cst_20 = arith.constant 0.00999999977 : f32
    %28 = vector.broadcast %cst_20 : f32 to vector<8x128xf32>
    %29 = arith.mulf %28, %25 : vector<8x128xf32>
    %30 = arith.select %27, %25, %29 : vector<8x128xi1>, vector<8x128xf32>
    %c0_21 = arith.constant 0 : index
    %c0_22 = arith.constant 0 : index
    %31 = vector.load %arg8[%c0_21, %c0_22] : memref<128x128xf32, #tpu.memory_space<vmem>>, vector<128x128xf32>
    %cst_23 = arith.constant dense<0.000000e+00> : vector<8x128xf32>
    %32 = tpu.matmul %30, %31, %cst_23 {dimension_numbers = #tpu.dot_dimension_numbers<[1], [0], [0], [1], [0, 0, 1, 1], [], []>} : vector<8x128xf32>, vector<128x128xf32>, vector<8x128xf32> -> vector<8x128xf32>
    %c0_24 = arith.constant 0 : index
    %c0_25 = arith.constant 0 : index
    %33 = vector.load %arg9[%c0_24, %c0_25] : memref<1x128xf32, #tpu.memory_space<vmem>>, vector<1x128xf32>
    %34 = vector.broadcast %33 : vector<1x128xf32> to vector<8x128xf32>
    %35 = arith.addf %32, %34 : vector<8x128xf32>
    %c0_26 = arith.constant 0 : index
    %c0_27 = arith.constant 0 : index
    %36 = vector.load %arg10[%c0_26, %c0_27] : memref<8x128xf32, #tpu.memory_space<vmem>>, vector<8x128xf32>
    tpu.vector_store %arg10[%c0_26, %c0_27], %35 {strides = array<i32>} : memref<8x128xf32, #tpu.memory_space<vmem>>, vector<8x128xf32>,
    return
  }
  func.func @transform_0(%arg0: i32) -> (i32, i32) {
    %c0_i32 = arith.constant 0 : i32
    %c0_i32_0 = arith.constant 0 : i32
    return %arg0, %c0_i32 : i32, i32
  }
  func.func @transform_1(%arg0: i32) -> (i32, i32) {
    %c0_i32 = arith.constant 0 : i32
    %c0_i32_0 = arith.constant 0 : i32
    %c0_i32_1 = arith.constant 0 : i32
    return %c0_i32, %c0_i32_0 : i32, i32
  }
  func.func @transform_2(%arg0: i32) -> (i32, i32) {
    %c0_i32 = arith.constant 0 : i32
    %c0_i32_0 = arith.constant 0 : i32
    %c0_i32_1 = arith.constant 0 : i32
    return %c0_i32, %c0_i32_0 : i32, i32
  }
  func.func @transform_3(%arg0: i32) -> (i32, i32) {
    %c0_i32 = arith.constant 0 : i32
    %c0_i32_0 = arith.constant 0 : i32
    %c0_i32_1 = arith.constant 0 : i32
    return %c0_i32, %c0_i32_0 : i32, i32
  }
  func.func @transform_4(%arg0: i32) -> (i32, i32) {
    %c0_i32 = arith.constant 0 : i32
    %c0_i32_0 = arith.constant 0 : i32
    %c0_i32_1 = arith.constant 0 : i32
    return %c0_i32, %c0_i32_0 : i32, i32
  }
  func.func @transform_5(%arg0: i32) -> (i32, i32) {
    %c0_i32 = arith.constant 0 : i32
    %c0_i32_0 = arith.constant 0 : i32
    %c0_i32_1 = arith.constant 0 : i32
    return %c0_i32, %c0_i32_0 : i32, i32
  }
  func.func @transform_6(%arg0: i32) -> (i32, i32) {
    %c0_i32 = arith.constant 0 : i32
    %c0_i32_0 = arith.constant 0 : i32
    %c0_i32_1 = arith.constant 0 : i32
    return %c0_i32, %c0_i32_0 : i32, i32
  }
  func.func @transform_7(%arg0: i32) -> (i32, i32) {
    %c0_i32 = arith.constant 0 : i32
    %c0_i32_0 = arith.constant 0 : i32
    %c0_i32_1 = arith.constant 0 : i32
    return %c0_i32, %c0_i32_0 : i32, i32
  }
  func.func @transform_8(%arg0: i32) -> (i32, i32) {
    %c0_i32 = arith.constant 0 : i32
    %c0_i32_0 = arith.constant 0 : i32
    %c0_i32_1 = arith.constant 0 : i32
    return %c0_i32, %c0_i32_0 : i32, i32
  }
  func.func @transform_9(%arg0: i32) -> (i32, i32) {
    %c0_i32 = arith.constant 0 : i32
    %c0_i32_0 = arith.constant 0 : i32
    return %arg0, %c0_i32 : i32, i32
  }
}

</mosaic_0001>

<llo_original>
// kernel: tpu_custom_call.1
$region0: #{tpu_custom_call.1}
  #allocation0 [shape = 'u32[]', space=smem, size = 0x4, offset = 0x4, fixed_abs, tag = 'smem constant byte address 0x4 - core index']
  #allocation1 [shape = 'u32[72,128]{1,0:T(1,128)}', space=vmem, size = 0x9000, scoped, tag = 'internal scratch']
  %s0 = inlined_call_operand.hbm [shape: f32[8,128], index: 0, kind: input, shape index: {}]
  %s1 = inlined_call_operand.hbm [shape: f32[128,128], index: 1, kind: input, shape index: {}]
  %s2 = inlined_call_operand.vmem [shape: f32[1,128], index: 2, kind: input, shape index: {}]
  %s3 = inlined_call_operand.hbm [shape: f32[128,128], index: 3, kind: input, shape index: {}]
  %s4 = inlined_call_operand.vmem [shape: f32[1,128], index: 4, kind: input, shape index: {}]
  %s5 = inlined_call_operand.hbm [shape: f32[128,128], index: 5, kind: input, shape index: {}]
  %s6 = inlined_call_operand.vmem [shape: f32[1,128], index: 6, kind: input, shape index: {}]
  %s7 = inlined_call_operand.hbm [shape: f32[128,128], index: 7, kind: input, shape index: {}]
  %s8 = inlined_call_operand.vmem [shape: f32[1,128], index: 8, kind: input, shape index: {}]
  %s9 = inlined_call_operand.hbm [shape: f32[8,128], index: 9, kind: output, shape index: {}]
  %s10 = sld [smem:[#allocation0]]
  $region66: #{tpu_custom_call.1} parent=0
    _
  %s12 = ssub.s32 1, %s10
  %s13 = scalar_select 0, %s12, %s10
  $region1: #{tpu_custom_call.1} parent=0
    #allocation2 [shape = 'u8[4096]{0}', space=vmem, size = 0x1000, scoped, tag = 'input window, operand 0, single buffered']
    #allocation3 [shape = 's32[1]{0}', space=sflag, size = 0x4, scoped, tag = 'scoped memory for tpu_custom_call.1']
    #allocation4 [shape = 's32[1]{0}', space=sflag, size = 0x4, scoped, tag = 'scoped memory for tpu_custom_call.1']
    #allocation5 [shape = 'u8[65536]{0}', space=vmem, size = 0x10000, scoped, tag = 'input window, operand 1, single buffered']
    #allocation6 [shape = 's32[1]{0}', space=sflag, size = 0x4, scoped, tag = 'scoped memory for tpu_custom_call.1']
    #allocation7 [shape = 'u8[65536]{0}', space=vmem, size = 0x10000, scoped, tag = 'input window, operand 3, single buffered']
    #allocation8 [shape = 'u8[65536]{0}', space=vmem, size = 0x10000, scoped, tag = 'input window, operand 5, single buffered']
    #allocation9 [shape = 's32[1]{0}', space=sflag, size = 0x4, scoped, tag = 'scoped memory for tpu_custom_call.1']
    #allocation10 [shape = 'u8[65536]{0}', space=vmem, size = 0x10000, scoped, tag = 'input window, operand 7, single buffered']
    #allocation11 [shape = 'u8[4096]{0}', space=vmem, size = 0x1000, scoped, tag = 'output window, operand 0, single buffered']
    %14 = vsyncpa [#allocation3], 0
    %15 = vsyncpa [#allocation6], 0
    %16 = vsyncpa [#allocation9], 0
    %17 = vsyncpa [#allocation4], 0
    // Predicated region
    $region2: #{tpu_custom_call.1} parent=1 // pred_check
      _
    $region3: #{tpu_custom_call.1} parent=1 // pred_check_branch
      %19 = sbr.rel (0) target = $region5
    $region4: #{tpu_custom_call.1} parent=1 // pred_region
      %21 = vsyncadd [#allocation3], 0
      %s23 = sshll.u32 %s0, 4
      %s24 = int_to_ptr.hbm [resolvable:$true] %s23
      %s25 = sshll.u32 [#allocation2], 4
      %s26 = int_to_ptr.vmem [resolvable:$true] %s25
      %28 = dma.hbm_to_vmem [thread:$0]  %s24, 128, %s26, [#allocation3]
    $region5: #{tpu_custom_call.1} parent=1 // pred_fallthru
      _
    // Predicated region
    $region6: #{tpu_custom_call.1} parent=1 // pred_check
      _
    $region7: #{tpu_custom_call.1} parent=1 // pred_check_branch
      %30 = sbr.rel (0) target = $region9
    $region8: #{tpu_custom_call.1} parent=1 // pred_region
      %32 = vsyncadd [#allocation6], 0
      %s33 = sshll.u32 %s1, 4
      %s34 = int_to_ptr.hbm [resolvable:$true] %s33
      %s35 = sshll.u32 [#allocation5], 4
      %s36 = int_to_ptr.vmem [resolvable:$true] %s35
      %41 = dma.hbm_to_vmem [thread:$0]  %s34, 2048, %s36, [#allocation6], 128, 128, 8
    $region9: #{tpu_custom_call.1} parent=1 // pred_fallthru
      _
    // Predicated region
    $region10: #{tpu_custom_call.1} parent=1 // pred_check
      _
    $region11: #{tpu_custom_call.1} parent=1 // pred_check_branch
      %43 = sbr.rel (0) target = $region13
    $region12: #{tpu_custom_call.1} parent=1 // pred_region
      _
    $region13: #{tpu_custom_call.1} parent=1 // pred_fallthru
      _
    // Predicated region
    $region14: #{tpu_custom_call.1} parent=1 // pred_check
      _
    $region15: #{tpu_custom_call.1} parent=1 // pred_check_branch
      %45 = sbr.rel (0) target = $region17
    $region16: #{tpu_custom_call.1} parent=1 // pred_region
      %47 = vsyncadd [#allocation6], 0
      %s48 = sshll.u32 %s3, 4
      %s49 = int_to_ptr.hbm [resolvable:$true] %s48
      %s50 = sshll.u32 [#allocation7], 4
      %s51 = int_to_ptr.vmem [resolvable:$true] %s50
      %56 = dma.hbm_to_vmem [thread:$0]  %s49, 2048, %s51, [#allocation6], 128, 128, 8
    $region17: #{tpu_custom_call.1} parent=1 // pred_fallthru
      _
    // Predicated region
    $region18: #{tpu_custom_call.1} parent=1 // pred_check
      _
    $region19: #{tpu_custom_call.1} parent=1 // pred_check_branch
      %58 = sbr.rel (0) target = $region21
    $region20: #{tpu_custom_call.1} parent=1 // pred_region
      _
    $region21: #{tpu_custom_call.1} parent=1 // pred_fallthru
      _
    // Predicated region
    $region22: #{tpu_custom_call.1} parent=1 // pred_check
      _
    $region23: #{tpu_custom_call.1} parent=1 // pred_check_branch
      %60 = sbr.rel (0) target = $region25
    $region24: #{tpu_custom_call.1} parent=1 // pred_region
      %62 = vsyncadd [#allocation9], 0
      %s63 = sshll.u32 %s5, 4
      %s64 = int_to_ptr.hbm [resolvable:$true] %s63
      %s65 = sshll.u32 [#allocation8], 4
      %s66 = int_to_ptr.vmem [resolvable:$true] %s65
      %71 = dma.hbm_to_vmem [thread:$0]  %s64, 2048, %s66, [#allocation9], 128, 128, 8
    $region25: #{tpu_custom_call.1} parent=1 // pred_fallthru
      _
    // Predicated region
    $region26: #{tpu_custom_call.1} parent=1 // pred_check
      _
    $region27: #{tpu_custom_call.1} parent=1 // pred_check_branch
      %73 = sbr.rel (0) target = $region29
    $region28: #{tpu_custom_call.1} parent=1 // pred_region
      _
    $region29: #{tpu_custom_call.1} parent=1 // pred_fallthru
      _
    // Predicated region
    $region30: #{tpu_custom_call.1} parent=1 // pred_check
      _
    $region31: #{tpu_custom_call.1} parent=1 // pred_check_branch
      %75 = sbr.rel (0) target = $region33
    $region32: #{tpu_custom_call.1} parent=1 // pred_region
      %77 = vsyncadd [#allocation9], 0
      %s78 = sshll.u32 %s7, 4
      %s79 = int_to_ptr.hbm [resolvable:$true] %s78
      %s80 = sshll.u32 [#allocation10], 4
      %s81 = int_to_ptr.vmem [resolvable:$true] %s80
      %86 = dma.hbm_to_vmem [thread:$0]  %s79, 2048, %s81, [#allocation9], 128, 128, 8
    $region33: #{tpu_custom_call.1} parent=1 // pred_fallthru
      _
    // Predicated region
    $region34: #{tpu_custom_call.1} parent=1 // pred_check
      _
    $region35: #{tpu_custom_call.1} parent=1 // pred_check_branch
      %88 = sbr.rel (0) target = $region37
    $region36: #{tpu_custom_call.1} parent=1 // pred_region
      _
    $region37: #{tpu_custom_call.1} parent=1 // pred_fallthru
      _
    // Predicated region
    $region38: #{tpu_custom_call.1} parent=1 // pred_check
      _
    $region39: #{tpu_custom_call.1} parent=1 // pred_check_branch
      %90 = sbr.rel (0) target = $region41
    $region40: #{tpu_custom_call.1} parent=1 // pred_region
      %92 = dma.done [#allocation3], 128
    $region41: #{tpu_custom_call.1} parent=1 // pred_fallthru
      _
    // Predicated region
    $region42: #{tpu_custom_call.1} parent=1 // pred_check
      _
    $region43: #{tpu_custom_call.1} parent=1 // pred_check_branch
      %94 = sbr.rel (0) target = $region45
    $region44: #{tpu_custom_call.1} parent=1 // pred_region
      %96 = dma.done [#allocation6], 2048
    $region45: #{tpu_custom_call.1} parent=1 // pred_fallthru
      _
    // Predicated region
    $region46: #{tpu_custom_call.1} parent=1 // pred_check
      _
    $region47: #{tpu_custom_call.1} parent=1 // pred_check_branch
      %98 = sbr.rel (0) target = $region49
    $region48: #{tpu_custom_call.1} parent=1 // pred_region
      %100 = dma.done [#allocation6], 2048
    $region49: #{tpu_custom_call.1} parent=1 // pred_fallthru
      _
    // Predicated region
    $region50: #{tpu_custom_call.1} parent=1 // pred_check
      _
    $region51: #{tpu_custom_call.1} parent=1 // pred_check_branch
      %102 = sbr.rel (0) target = $region53
    $region52: #{tpu_custom_call.1} parent=1 // pred_region
      %104 = dma.done [#allocation9], 2048
    $region53: #{tpu_custom_call.1} parent=1 // pred_fallthru
      _
    // Predicated region
    $region54: #{tpu_custom_call.1} parent=1 // pred_check
      _
    $region55: #{tpu_custom_call.1} parent=1 // pred_check_branch
      %106 = sbr.rel (0) target = $region57
    $region56: #{tpu_custom_call.1} parent=1 // pred_region
      %108 = dma.done [#allocation9], 2048
    $region57: #{tpu_custom_call.1} parent=1 // pred_fallthru
      _
    %v109 = vld [vmem:[#allocation2] sm:$0xff]
    %v110 = vld [vmem:[#allocation5] sm:$0xff]
    %v111 = vld [vmem:[#allocation5 + $0x8] sm:$0xff]
    %v112 = vld [vmem:[#allocation5 + $0x10] sm:$0xff]
    %v113 = vld [vmem:[#allocation5 + $0x18] sm:$0xff]
    %v114 = vld [vmem:[#allocation5 + $0x20] sm:$0xff]
    %v115 = vld [vmem:[#allocation5 + $0x28] sm:$0xff]
    %v116 = vld [vmem:[#allocation5 + $0x30] sm:$0xff]
    %v117 = vld [vmem:[#allocation5 + $0x38] sm:$0xff]
    %v118 = vld [vmem:[#allocation5 + $0x40] sm:$0xff]
    %v119 = vld [vmem:[#allocation5 + $0x48] sm:$0xff]
    %v120 = vld [vmem:[#allocation5 + $0x50] sm:$0xff]
    %v121 = vld [vmem:[#allocation5 + $0x58] sm:$0xff]
    %v122 = vld [vmem:[#allocation5 + $0x60] sm:$0xff]
    %v123 = vld [vmem:[#allocation5 + $0x68] sm:$0xff]
    %v124 = vld [vmem:[#allocation5 + $0x70] sm:$0xff]
    %v125 = vld [vmem:[#allocation5 + $0x78] sm:$0xff]
    %v126 = vld [vmem:[%s2] sm:$0x1]
    %v128 = vperm.slane %v126, 0
    %130 = vmatpush.msra.mxu0 %v125
    %131 = vmatpush.msra.mxu0 %v124
    %132 = vmatpush.msra.mxu0 %v123
    %133 = vmatpush.msra.mxu0 %v122
    %134 = vmatpush.msra.mxu0 %v121
    %135 = vmatpush.msra.mxu0 %v120
    %136 = vmatpush.msra.mxu0 %v119
    %137 = vmatpush.msra.mxu0 %v118
    %138 = vmatpush.msra.mxu0 %v117
    %139 = vmatpush.msra.mxu0 %v116
    %140 = vmatpush.msra.mxu0 %v115
    %141 = vmatpush.msra.mxu0 %v114
    %142 = vmatpush.msra.mxu0 %v113
    %143 = vmatpush.msra.mxu0 %v112
    %144 = vmatpush.msra.mxu0 %v111
    %145 = vmatpush.msra.mxu0 %v110
    %146 = vmatmul.f32.gmra.mxu0 %v109
    %v147 = vpop.f32.mrf.mxu0
    %v148 = vadd.f32 %v128, %v147
    %149 = vdwg.mxu0
    %vm150 = vcmp.gt.f32.partialorder %v148, 0.0
    %v151 = vmul.f32 %v148, 0.01
    %v152 = vsel %vm150, %v148, %v151
    %v153 = vld [vmem:[#allocation7] sm:$0xff]
    %v154 = vld [vmem:[#allocation7 + $0x8] sm:$0xff]
    %v155 = vld [vmem:[#allocation7 + $0x10] sm:$0xff]
    %v156 = vld [vmem:[#allocation7 + $0x18] sm:$0xff]
    %v157 = vld [vmem:[#allocation7 + $0x20] sm:$0xff]
    %v158 = vld [vmem:[#allocation7 + $0x28] sm:$0xff]
    %v159 = vld [vmem:[#allocation7 + $0x30] sm:$0xff]
    %v160 = vld [vmem:[#allocation7 + $0x38] sm:$0xff]
    %v161 = vld [vmem:[#allocation7 + $0x40] sm:$0xff]
    %v162 = vld [vmem:[#allocation7 + $0x48] sm:$0xff]
    %v163 = vld [vmem:[#allocation7 + $0x50] sm:$0xff]
    %v164 = vld [vmem:[#allocation7 + $0x58] sm:$0xff]
    %v165 = vld [vmem:[#allocation7 + $0x60] sm:$0xff]
    %v166 = vld [vmem:[#allocation7 + $0x68] sm:$0xff]
    %v167 = vld [vmem:[#allocation7 + $0x70] sm:$0xff]
    %v168 = vld [vmem:[#allocation7 + $0x78] sm:$0xff]
    %v169 = vld [vmem:[%s4] sm:$0x1]
    %v171 = vperm.slane %v169, 0
    %173 = vmatpush.msra.mxu0 %v168
    %174 = vmatpush.msra.mxu0 %v167
    %175 = vmatpush.msra.mxu0 %v166
    %176 = vmatpush.msra.mxu0 %v165
    %177 = vmatpush.msra.mxu0 %v164
    %178 = vmatpush.msra.mxu0 %v163
    %179 = vmatpush.msra.mxu0 %v162
    %180 = vmatpush.msra.mxu0 %v161
    %181 = vmatpush.msra.mxu0 %v160
    %182 = vmatpush.msra.mxu0 %v159
    %183 = vmatpush.msra.mxu0 %v158
    %184 = vmatpush.msra.mxu0 %v157
    %185 = vmatpush.msra.mxu0 %v156
    %186 = vmatpush.msra.mxu0 %v155
    %187 = vmatpush.msra.mxu0 %v154
    %188 = vmatpush.msra.mxu0 %v153
    %189 = vmatmul.f32.gmra.mxu0 %v152
    %v190 = vpop.f32.mrf.mxu0
    %v191 = vadd.f32 %v171, %v190
    %192 = vdwg.mxu0
    %vm193 = vcmp.gt.f32.partialorder %v191, 0.0
    %v194 = vmul.f32 %v191, 0.01
    %v195 = vsel %vm193, %v191, %v194
    %v196 = vld [vmem:[#allocation8] sm:$0xff]
    %v197 = vld [vmem:[#allocation8 + $0x8] sm:$0xff]
    %v198 = vld [vmem:[#allocation8 + $0x10] sm:$0xff]
    %v199 = vld [vmem:[#allocation8 + $0x18] sm:$0xff]
    %v200 = vld [vmem:[#allocation8 + $0x20] sm:$0xff]
    %v201 = vld [vmem:[#allocation8 + $0x28] sm:$0xff]
    %v202 = vld [vmem:[#allocation8 + $0x30] sm:$0xff]
    %v203 = vld [vmem:[#allocation8 + $0x38] sm:$0xff]
    %v204 = vld [vmem:[#allocation8 + $0x40] sm:$0xff]
    %v205 = vld [vmem:[#allocation8 + $0x48] sm:$0xff]
    %v206 = vld [vmem:[#allocation8 + $0x50] sm:$0xff]
    %v207 = vld [vmem:[#allocation8 + $0x58] sm:$0xff]
    %v208 = vld [vmem:[#allocation8 + $0x60] sm:$0xff]
    %v209 = vld [vmem:[#allocation8 + $0x68] sm:$0xff]
    %v210 = vld [vmem:[#allocation8 + $0x70] sm:$0xff]
    %v211 = vld [vmem:[#allocation8 + $0x78] sm:$0xff]
    %v212 = vld [vmem:[%s6] sm:$0x1]
    %v214 = vperm.slane %v212, 0
    %216 = vmatpush.msra.mxu0 %v211
    %217 = vmatpush.msra.mxu0 %v210
    %218 = vmatpush.msra.mxu0 %v209
    %219 = vmatpush.msra.mxu0 %v208
    %220 = vmatpush.msra.mxu0 %v207
    %221 = vmatpush.msra.mxu0 %v206
    %222 = vmatpush.msra.mxu0 %v205
    %223 = vmatpush.msra.mxu0 %v204
    %224 = vmatpush.msra.mxu0 %v203
    %225 = vmatpush.msra.mxu0 %v202
    %226 = vmatpush.msra.mxu0 %v201
    %227 = vmatpush.msra.mxu0 %v200
    %228 = vmatpush.msra.mxu0 %v199
    %229 = vmatpush.msra.mxu0 %v198
    %230 = vmatpush.msra.mxu0 %v197
    %231 = vmatpush.msra.mxu0 %v196
    %232 = vmatmul.f32.gmra.mxu0 %v195
    %v233 = vpop.f32.mrf.mxu0
    %v234 = vadd.f32 %v214, %v233
    %235 = vdwg.mxu0
    %vm236 = vcmp.gt.f32.partialorder %v234, 0.0
    %v237 = vmul.f32 %v234, 0.01
    %v238 = vsel %vm236, %v234, %v237
    %v239 = vld [vmem:[#allocation10] sm:$0xff]
    %v240 = vld [vmem:[#allocation10 + $0x8] sm:$0xff]
    %v241 = vld [vmem:[#allocation10 + $0x10] sm:$0xff]
    %v242 = vld [vmem:[#allocation10 + $0x18] sm:$0xff]
    %v243 = vld [vmem:[#allocation10 + $0x20] sm:$0xff]
    %v244 = vld [vmem:[#allocation10 + $0x28] sm:$0xff]
    %v245 = vld [vmem:[#allocation10 + $0x30] sm:$0xff]
    %v246 = vld [vmem:[#allocation10 + $0x38] sm:$0xff]
    %v247 = vld [vmem:[#allocation10 + $0x40] sm:$0xff]
    %v248 = vld [vmem:[#allocation10 + $0x48] sm:$0xff]
    %v249 = vld [vmem:[#allocation10 + $0x50] sm:$0xff]
    %v250 = vld [vmem:[#allocation10 + $0x58] sm:$0xff]
    %v251 = vld [vmem:[#allocation10 + $0x60] sm:$0xff]
    %v252 = vld [vmem:[#allocation10 + $0x68] sm:$0xff]
    %v253 = vld [vmem:[#allocation10 + $0x70] sm:$0xff]
    %v254 = vld [vmem:[#allocation10 + $0x78] sm:$0xff]
    %v255 = vld [vmem:[%s8] sm:$0x1]
    %v257 = vperm.slane %v255, 0
    %259 = vmatpush.msra.mxu0 %v254
    %260 = vmatpush.msra.mxu0 %v253
    %261 = vmatpush.msra.mxu0 %v252
    %262 = vmatpush.msra.mxu0 %v251
    %263 = vmatpush.msra.mxu0 %v250
    %264 = vmatpush.msra.mxu0 %v249
    %265 = vmatpush.msra.mxu0 %v248
    %266 = vmatpush.msra.mxu0 %v247
    %267 = vmatpush.msra.mxu0 %v246
    %268 = vmatpush.msra.mxu0 %v245
    %269 = vmatpush.msra.mxu0 %v244
    %270 = vmatpush.msra.mxu0 %v243
    %271 = vmatpush.msra.mxu0 %v242
    %272 = vmatpush.msra.mxu0 %v241
    %273 = vmatpush.msra.mxu0 %v240
    %274 = vmatpush.msra.mxu0 %v239
    %275 = vmatmul.f32.gmra.mxu0 %v238
    %v276 = vpop.f32.mrf.mxu0
    %v277 = vadd.f32 %v257, %v276
    %278 = vdwg.mxu0
    %279 = vst [vmem:[#allocation11] sm:$0xff] %v277
    // Predicated region
    $region58: #{tpu_custom_call.1} parent=1 // pred_check
      _
    $region59: #{tpu_custom_call.1} parent=1 // pred_check_branch
      %281 = sbr.rel (0) target = $region61
    $region60: #{tpu_custom_call.1} parent=1 // pred_region
      %283 = vsyncadd [#allocation4], 0
      %s285 = sshll.u32 [#allocation11], 4
      %s286 = int_to_ptr.vmem [resolvable:$true] %s285
      %s287 = sshll.u32 %s9, 4
      %s288 = int_to_ptr.hbm [resolvable:$true] %s287
      %290 = dma.vmem_to_hbm [thread:$0]  %s286, 128, %s288, [#allocation4]
    $region61: #{tpu_custom_call.1} parent=1 // pred_fallthru
      _
    // Predicated region
    $region62: #{tpu_custom_call.1} parent=1 // pred_check
      _
    $region63: #{tpu_custom_call.1} parent=1 // pred_check_branch
      %292 = sbr.rel (0) target = $region65
    $region64: #{tpu_custom_call.1} parent=1 // pred_region
      %294 = dma.done [#allocation4], 128
    $region65: #{tpu_custom_call.1} parent=1 // pred_fallthru
      _
    %295 = vsyncpa [#allocation3], 1
    %296 = vsyncpa [#allocation6], 1
    %297 = vsyncpa [#allocation9], 1
    %298 = vsyncpa [#allocation4], 1

</llo_original>
